<compile_context>
chip_gen: v6e
topology: v6e:2x2x1
jax: 0.10.0
libtpu: 0.0.40
codegen_flags: <defaults>
</compile_context>

<pallas_src>
import numpy as np
import jax
import jax.numpy as jnp
from jax.experimental import pallas as pl
from jax.experimental.pallas import tpu as pltpu


def _round_up(x, m):
    return ((x + m - 1) // m) * m


# --------------------------------------------------------------------------------------
# Kernel 1: fused DFT — rfft along longitude expressed as one MXU matmul per batch elem.
# --------------------------------------------------------------------------------------
def _dft_kernel(x_ref, f_ref, y_ref):
    # x_ref: (1, 2*nlat_pad, nlon_pad)  both vector components of one batch element
    # f_ref: (nlon_pad, 2*m_pad)        [Re | Im] DFT matrix, incl. the 2*pi/nlon factor
    # y_ref: (1, 2*nlat_pad, 2*m_pad)
    y_ref[0] = jnp.dot(x_ref[0], f_ref[...], preferred_element_type=jnp.float32)


# --------------------------------------------------------------------------------------
# Kernel 2: m-batched Legendre contraction on the MXU + sign recombination.
# --------------------------------------------------------------------------------------
def _legendre_kernel(xf_ref, w_ref, o_ref):
    # xf_ref: (1, m_tile, nlat_pad, 4*b_tile)  spectra, lane chunks [xr0 | xi0 | xr1 | xi1]
    # w_ref : (m_tile, 2*l_pad, nlat_pad)      [W0 ; W1] stacked along the row axis
    # o_ref : (1, m_tile, 2*l_pad, 2*b_tile)   [[o0r | o0i] ; [o1r | o1i]]
    rhs = xf_ref[0]
    w = w_ref[...]
    # One batched matmul over m covers all 8 Legendre contractions of the reference.
    res = jnp.einsum('mlk,mkn->mln', w, rhs, preferred_element_type=jnp.float32)
    l_pad = w.shape[1] // 2
    b = o_ref.shape[3] // 2
    c0 = res[:, :l_pad, :]        # contractions against W0
    c1 = res[:, l_pad:, :]        # contractions against W1
    o0r = c0[:, :, 0 * b:1 * b] - c1[:, :, 3 * b:4 * b]
    o0i = c0[:, :, 1 * b:2 * b] + c1[:, :, 2 * b:3 * b]
    o1r = -c1[:, :, 1 * b:2 * b] - c0[:, :, 2 * b:3 * b]
    o1i = c1[:, :, 0 * b:1 * b] - c0[:, :, 3 * b:4 * b]
    o_ref[0] = jnp.concatenate(
        [jnp.concatenate([o0r, o0i], axis=2),
         jnp.concatenate([o1r, o1i], axis=2)], axis=1)


def real_vector_sht(x, weights, *, b_tile=None, m_tile=None):
    """x: (..., 2, nlat, nlon) float32; weights: (2, mmax, lmax, nlat) float32.
    Returns (..., 2, lmax, mmax) complex64 (matches RealVectorSHT.forward)."""
    *batch, two, nlat, nlon = x.shape
    assert two == 2
    _, mmax, lmax, nlat_w = weights.shape
    assert nlat_w == nlat
    b = int(np.prod(batch)) if batch else 1

    # ---- padded / tiled sizes ----------------------------------------------------------
    nlat_pad = _round_up(nlat, 8)       # Legendre contraction (K) dim, f32 sublane tile
    nlon_pad = _round_up(nlon, 8)       # DFT contraction dim
    l_pad = _round_up(lmax, 8)
    if b_tile is None:
        b_tile = min(b, 8)              # production: raise (>=64 gives >=128-lane stores)
    b_pad = _round_up(b, b_tile)
    n_bt = b_pad // b_tile
    if m_tile is None:
        # Size the weight tile (double-buffered by the pipeline) to ~4 MiB so it fits the
        # default scoped VMEM limit on every generation (v7x has only 64 MiB physical).
        per_m_bytes = 2 * l_pad * nlat_pad * 4
        m_tile = max(8, (4 * 1024 * 1024 // per_m_bytes) // 8 * 8)
        m_tile = min(m_tile, _round_up(mmax, 8))
    m_pad = _round_up(mmax, m_tile)
    n_mt = m_pad // m_tile

    f32 = jnp.float32

    # ---- inputs (single padded copy; no per-component splits) ---------------------------
    xf = x.reshape(b, 2, nlat, nlon).astype(f32)
    xf = jnp.pad(xf, ((0, b_pad - b), (0, 0), (0, nlat_pad - nlat), (0, nlon_pad - nlon)))
    x_in = xf.reshape(b_pad, 2 * nlat_pad, nlon_pad)

    # DFT matrix for 2*pi * rfft(..., norm='forward'), zero-padded, [Re | Im] columns.
    n = np.arange(nlon)[:, None]
    m = np.arange(mmax)[None, :]
    ang = 2.0 * np.pi * n * m / nlon
    fmat = np.zeros((nlon_pad, 2 * m_pad), dtype=np.float32)
    fmat[:nlon, :mmax] = (2.0 * np.pi / nlon) * np.cos(ang)
    fmat[:nlon, m_pad:m_pad + mmax] = -(2.0 * np.pi / nlon) * np.sin(ang)
    fmat = jnp.asarray(fmat)

    # Weights: (2, mmax, lmax, nlat) -> (m_pad, 2*l_pad, nlat_pad) with [W0 ; W1] rows so a
    # single batched matmul per m-tile covers every contraction of the reference.
    wt = jnp.transpose(weights.astype(f32), (1, 0, 2, 3))            # (mmax, 2, lmax, nlat)
    wt = jnp.pad(wt, ((0, m_pad - mmax), (0, 0), (0, l_pad - lmax), (0, nlat_pad - nlat)))
    wt = wt.reshape(m_pad, 2 * l_pad, nlat_pad)
    # (v6e/v7x option: cast x_in / fmat / wt to bfloat16 here and keep f32 accumulation.)

    # ---- kernel 1: fused DFT -------------------------------------------------------------
    y = pl.pallas_call(
        _dft_kernel,
        out_shape=jax.ShapeDtypeStruct((b_pad, 2 * nlat_pad, 2 * m_pad), f32),
        grid=(b_pad,),
        in_specs=[
            pl.BlockSpec((1, 2 * nlat_pad, nlon_pad), lambda i: (i, 0, 0)),
            pl.BlockSpec((nlon_pad, 2 * m_pad), lambda i: (0, 0)),
        ],
        out_specs=pl.BlockSpec((1, 2 * nlat_pad, 2 * m_pad), lambda i: (i, 0, 0)),
        compiler_params=pltpu.CompilerParams(dimension_semantics=("parallel",)),
    )(x_in, fmat)

    # ---- layout plumbing: m -> leading (matmul batch) axis, batch tile -> lanes ----------
    y = y.reshape(n_bt, b_tile, 2, nlat_pad, 2, m_pad)      # (bi, j, d, k, reim, m)
    y = jnp.transpose(y, (0, 5, 3, 2, 4, 1))                # (bi, m, k, d, reim, j)
    xfs = y.reshape(n_bt, m_pad, nlat_pad, 4 * b_tile)      # lanes: [xr0 | xi0 | xr1 | xi1]

    # ---- kernel 2: Legendre contraction, grid tiled over (batch tiles, m tiles) ----------
    slab = pl.pallas_call(
        _legendre_kernel,
        out_shape=jax.ShapeDtypeStruct((n_bt, m_pad, 2 * l_pad, 2 * b_tile), f32),
        grid=(n_bt, n_mt),
        in_specs=[
            pl.BlockSpec((1, m_tile, nlat_pad, 4 * b_tile), lambda bi, mi: (bi, mi, 0, 0)),
            pl.BlockSpec((m_tile, 2 * l_pad, nlat_pad), lambda bi, mi: (mi, 0, 0)),
        ],
        out_specs=pl.BlockSpec((1, m_tile, 2 * l_pad, 2 * b_tile),
                               lambda bi, mi: (bi, mi, 0, 0)),
        compiler_params=pltpu.CompilerParams(
            dimension_semantics=("parallel", "parallel")),
    )(xfs, wt)

    # ---- unpack the merged slab to the module's output layout ----------------------------
    slab = slab[:, :mmax]                                   # (n_bt, mmax, 2*l_pad, 2*b_tile)
    o0 = jax.lax.complex(slab[:, :, :lmax, :b_tile], slab[:, :, :lmax, b_tile:])
    o1 = jax.lax.complex(slab[:, :, l_pad:l_pad + lmax, :b_tile],
                         slab[:, :, l_pad:l_pad + lmax, b_tile:])
    out = jnp.stack([o0, o1], axis=-1)                      # (n_bt, mmax, lmax, b_tile, 2)
    out = jnp.transpose(out, (0, 3, 4, 2, 1))               # (n_bt, b_tile, 2, lmax, mmax)
    out = out.reshape(b_pad, 2, lmax, mmax)[:b]
    return out.reshape(*batch, 2, lmax, mmax).astype(jnp.complex64)


def init_weights(nlat, nlon, lmax=None, mmax=None, key=None):
    """Deterministic synthetic stand-in for the RealVectorSHT weights buffer."""
    lmax = lmax or nlat
    mmax = mmax or nlon // 2 + 1
    key = key if key is not None else jax.random.PRNGKey(42)
    # TODO(synk): _precompute_dlegpoly (derivatives of associated Legendre polynomials on
    # Clenshaw-Curtiss nodes) is not re-implemented here; a deterministic random tensor of
    # the same shape (2, mmax, lmax, nlat) stands in for it.
    dpct = jax.random.normal(key, (2, mmax, lmax, nlat), dtype=jnp.float32)
    quad_w = jnp.full((nlat,), 2.0 / nlat, dtype=jnp.float32)  # stand-in quadrature weights
    l = jnp.arange(lmax, dtype=jnp.float32)
    norm_factor = jnp.where(l > 0, 1.0 / jnp.maximum(l * (l + 1.0), 1.0), 1.0)
    w = jnp.einsum('dmlk,k,l->dmlk', dpct, quad_w, norm_factor)
    w = w.at[1].multiply(-1.0)  # weights[1] = -weights[1] as in the module
    return w


def reference(x, weights):
    """Pure-JAX reference mirroring the PyTorch forward exactly."""
    mmax = weights.shape[1]
    hi = jax.lax.Precision.HIGHEST
    xf = 2.0 * jnp.pi * jnp.fft.rfft(x.astype(jnp.float32), axis=-1, norm='forward')
    xf = xf[..., :mmax]
    xr0 = jnp.real(xf[..., 0, :, :]); xi0 = jnp.imag(xf[..., 0, :, :])
    xr1 = jnp.real(xf[..., 1, :, :]); xi1 = jnp.imag(xf[..., 1, :, :])
    w0, w1 = weights[0], weights[1]
    c = lambda a, w: jnp.einsum('...km,mlk->...lm', a, w, precision=hi)
    o0 = jax.lax.complex(c(xr0, w0) - c(xi1, w1), c(xi0, w0) + c(xr1, w1))
    o1 = jax.lax.complex(-c(xi0, w1) - c(xr1, w0), c(xr0, w1) - c(xi1, w0))
    return jnp.stack([o0, o1], axis=-3)


if __name__ == "__main__":
    key = jax.random.PRNGKey(0)
    kx, kw = jax.random.split(key)

    B, nlat, nlon = 2, 8, 16          # small demo shapes
    x = jax.random.normal(kx, (B, 2, nlat, nlon), dtype=jnp.float32)
    weights = init_weights(nlat, nlon, key=kw)   # (2, mmax=9, lmax=8, nlat=8)

    sht = jax.jit(real_vector_sht)
    out = jax.block_until_ready(sht(x, weights))

    ref = reference(x, weights)
    np.testing.assert_allclose(np.asarray(out), np.asarray(ref), rtol=1e-2, atol=1e-2)
    assert out.shape == (B, 2, nlat, nlon // 2 + 1) and out.dtype == jnp.complex64

    print("KERNEL_OK")
</pallas_src>

<mosaic_0001>
module attributes {stable_mosaic.version = 11 : i64} {
  func.func @_dft_kernel(%arg0: i32, %arg1: memref<1x16x16xf32, #tpu.memory_space<vmem>>, %arg2: memref<16x32xf32, #tpu.memory_space<vmem>>, %arg3: memref<1x16x32xf32, #tpu.memory_space<vmem>>) attributes {dimension_semantics = [#tpu.dimension_semantics<parallel>], iteration_bounds = array<i64: 2>, scalar_prefetch = 0 : i64, scratch_operands = 0 : i64, tpu.core_type = #tpu.core_type<tc>, window_params = [{transform_indices = @transform_0, window_bounds = array<i64: 1, 16, 16>}, {pipeline_mode = #tpu.pipeline_mode<synchronous>, transform_indices = @transform_1, window_bounds = array<i64: 16, 32>}, {transform_indices = @transform_2, window_bounds = array<i64: 1, 16, 32>}]} {
    %c0 = arith.constant 0 : index
    %c0_0 = arith.constant 0 : index
    %c0_1 = arith.constant 0 : index
    %0 = vector.load %arg1[%c0, %c0_0, %c0_1] : memref<1x16x16xf32, #tpu.memory_space<vmem>>, vector<1x16x16xf32>
    %1 = vector.shape_cast %0 : vector<1x16x16xf32> to vector<16x16xf32>
    %c0_2 = arith.constant 0 : index
    %c0_3 = arith.constant 0 : index
    %2 = vector.load %arg2[%c0_2, %c0_3] : memref<16x32xf32, #tpu.memory_space<vmem>>, vector<16x32xf32>
    %cst = arith.constant dense<0.000000e+00> : vector<16x32xf32>
    %3 = tpu.matmul %1, %2, %cst {dimension_numbers = #tpu.dot_dimension_numbers<[1], [0], [0], [1], [0, 0, 1, 1], [], []>} : vector<16x16xf32>, vector<16x32xf32>, vector<16x32xf32> -> vector<16x32xf32>
    %c0_4 = arith.constant 0 : index
    %c0_5 = arith.constant 0 : index
    %c0_6 = arith.constant 0 : index
    %4 = vector.load %arg3[%c0_4, %c0_5, %c0_6] : memref<1x16x32xf32, #tpu.memory_space<vmem>>, vector<1x16x32xf32>
    %5 = vector.shape_cast %4 : vector<1x16x32xf32> to vector<16x32xf32>
    %6 = vector.shape_cast %3 : vector<16x32xf32> to vector<1x16x32xf32>
    tpu.vector_store %arg3[%c0_4, %c0_5, %c0_6], %6 {strides = array<i32>} : memref<1x16x32xf32, #tpu.memory_space<vmem>>, vector<1x16x32xf32>,
    return
  }
  func.func @transform_0(%arg0: i32) -> (i32, i32, i32) {
    %c0_i32 = arith.constant 0 : i32
    %c0_i32_0 = arith.constant 0 : i32
    %c0_i32_1 = arith.constant 0 : i32
    return %arg0, %c0_i32, %c0_i32_0 : i32, i32, i32
  }
  func.func @transform_1(%arg0: i32) -> (i32, i32) {
    %c0_i32 = arith.constant 0 : i32
    %c0_i32_0 = arith.constant 0 : i32
    %c0_i32_1 = arith.constant 0 : i32
    return %c0_i32, %c0_i32_0 : i32, i32
  }
  func.func @transform_2(%arg0: i32) -> (i32, i32, i32) {
    %c0_i32 = arith.constant 0 : i32
    %c0_i32_0 = arith.constant 0 : i32
    %c0_i32_1 = arith.constant 0 : i32
    return %arg0, %c0_i32, %c0_i32_0 : i32, i32, i32
  }
}

module attributes {stable_mosaic.version = 11 : i64} {
  func.func @_legendre_kernel(%arg0: i32, %arg1: i32, %arg2: memref<1x16x8x8xf32, #tpu.memory_space<vmem>>, %arg3: memref<16x16x8xf32, #tpu.memory_space<vmem>>, %arg4: memref<1x16x16x4xf32, #tpu.memory_space<vmem>>) attributes {dimension_semantics = [#tpu.dimension_semantics<parallel>, #tpu.dimension_semantics<parallel>], iteration_bounds = array<i64: 1, 1>, scalar_prefetch = 0 : i64, scratch_operands = 0 : i64, tpu.core_type = #tpu.core_type<tc>, window_params = [{transform_indices = @transform_0, window_bounds = array<i64: 1, 16, 8, 8>}, {transform_indices = @transform_1, window_bounds = array<i64: 16, 16, 8>}, {transform_indices = @transform_2, window_bounds = array<i64: 1, 16, 16, 4>}]} {
    %c0 = arith.constant 0 : index
    %c0_0 = arith.constant 0 : index
    %c0_1 = arith.constant 0 : index
    %c0_2 = arith.constant 0 : index
    %0 = vector.load %arg2[%c0, %c0_0, %c0_1, %c0_2] : memref<1x16x8x8xf32, #tpu.memory_space<vmem>>, vector<1x16x8x8xf32>
    %1 = vector.shape_cast %0 : vector<1x16x8x8xf32> to vector<16x8x8xf32>
    %c0_3 = arith.constant 0 : index
    %c0_4 = arith.constant 0 : index
    %c0_5 = arith.constant 0 : index
    %2 = vector.load %arg3[%c0_3, %c0_4, %c0_5] : memref<16x16x8xf32, #tpu.memory_space<vmem>>, vector<16x16x8xf32>
    "tpu.trace_start"() <{level = 10 : i32, message = "mlk,mkn->mln"}> : () -> ()
    %cst = arith.constant dense<0.000000e+00> : vector<16x16x8xf32>
    %3 = tpu.matmul %2, %1, %cst {dimension_numbers = #tpu.dot_dimension_numbers<[2], [1], [1], [2], [0, 0, 0, 1, 1, 2], [0], [0]>} : vector<16x16x8xf32>, vector<16x8x8xf32>, vector<16x16x8xf32> -> vector<16x16x8xf32>
    "tpu.trace_stop"() : () -> ()
    %4 = vector.extract_strided_slice %3 {offsets = [0, 0, 0], sizes = [16, 8, 8], strides = [1, 1, 1]} : vector<16x16x8xf32> to vector<16x8x8xf32>
    %5 = vector.extract_strided_slice %3 {offsets = [0, 8, 0], sizes = [16, 8, 8], strides = [1, 1, 1]} : vector<16x16x8xf32> to vector<16x8x8xf32>
    %6 = vector.extract_strided_slice %4 {offsets = [0, 0, 0], sizes = [16, 8, 2], strides = [1, 1, 1]} : vector<16x8x8xf32> to vector<16x8x2xf32>
    %7 = vector.extract_strided_slice %5 {offsets = [0, 0, 6], sizes = [16, 8, 2], strides = [1, 1, 1]} : vector<16x8x8xf32> to vector<16x8x2xf32>
    %8 = arith.subf %6, %7 : vector<16x8x2xf32>
    %9 = vector.extract_strided_slice %4 {offsets = [0, 0, 2], sizes = [16, 8, 2], strides = [1, 1, 1]} : vector<16x8x8xf32> to vector<16x8x2xf32>
    %10 = vector.extract_strided_slice %5 {offsets = [0, 0, 4], sizes = [16, 8, 2], strides = [1, 1, 1]} : vector<16x8x8xf32> to vector<16x8x2xf32>
    %11 = arith.addf %9, %10 : vector<16x8x2xf32>
    %12 = vector.extract_strided_slice %5 {offsets = [0, 0, 2], sizes = [16, 8, 2], strides = [1, 1, 1]} : vector<16x8x8xf32> to vector<16x8x2xf32>
    %cst_6 = arith.constant 0.000000e+00 : f32
    %13 = vector.broadcast %cst_6 : f32 to vector<16x8x2xf32>
    %14 = arith.subf %13, %12 : vector<16x8x2xf32>
    %15 = vector.extract_strided_slice %4 {offsets = [0, 0, 4], sizes = [16, 8, 2], strides = [1, 1, 1]} : vector<16x8x8xf32> to vector<16x8x2xf32>
    %16 = arith.subf %14, %15 : vector<16x8x2xf32>
    %17 = vector.extract_strided_slice %5 {offsets = [0, 0, 0], sizes = [16, 8, 2], strides = [1, 1, 1]} : vector<16x8x8xf32> to vector<16x8x2xf32>
    %18 = vector.extract_strided_slice %4 {offsets = [0, 0, 6], sizes = [16, 8, 2], strides = [1, 1, 1]} : vector<16x8x8xf32> to vector<16x8x2xf32>
    %19 = arith.subf %17, %18 : vector<16x8x2xf32>
    %20 = tpu.concatenate %8, %11 in 2 : vector<16x8x2xf32>, vector<16x8x2xf32> -> vector<16x8x4xf32>
    %21 = tpu.concatenate %16, %19 in 2 : vector<16x8x2xf32>, vector<16x8x2xf32> -> vector<16x8x4xf32>
    %22 = tpu.concatenate %20, %21 in 1 : vector<16x8x4xf32>, vector<16x8x4xf32> -> vector<16x16x4xf32>
    %c0_7 = arith.constant 0 : index
    %c0_8 = arith.constant 0 : index
    %c0_9 = arith.constant 0 : index
    %c0_10 = arith.constant 0 : index
    %23 = vector.load %arg4[%c0_7, %c0_8, %c0_9, %c0_10] : memref<1x16x16x4xf32, #tpu.memory_space<vmem>>, vector<1x16x16x4xf32>
    %24 = vector.shape_cast %23 : vector<1x16x16x4xf32> to vector<16x16x4xf32>
    %25 = vector.shape_cast %22 : vector<16x16x4xf32> to vector<1x16x16x4xf32>
    tpu.vector_store %arg4[%c0_7, %c0_8, %c0_9, %c0_10], %25 {strides = array<i32>} : memref<1x16x16x4xf32, #tpu.memory_space<vmem>>, vector<1x16x16x4xf32>,
    return
  }
  func.func @transform_0(%arg0: i32, %arg1: i32) -> (i32, i32, i32, i32) {
    %c0_i32 = arith.constant 0 : i32
    %c0_i32_0 = arith.constant 0 : i32
    %c0_i32_1 = arith.constant 0 : i32
    return %arg0, %arg1, %c0_i32, %c0_i32_0 : i32, i32, i32, i32
  }
  func.func @transform_1(%arg0: i32, %arg1: i32) -> (i32, i32, i32) {
    %c0_i32 = arith.constant 0 : i32
    %c0_i32_0 = arith.constant 0 : i32
    %c0_i32_1 = arith.constant 0 : i32
    return %arg1, %c0_i32, %c0_i32_0 : i32, i32, i32
  }
  func.func @transform_2(%arg0: i32, %arg1: i32) -> (i32, i32, i32, i32) {
    %c0_i32 = arith.constant 0 : i32
    %c0_i32_0 = arith.constant 0 : i32
    %c0_i32_1 = arith.constant 0 : i32
    return %arg0, %arg1, %c0_i32, %c0_i32_0 : i32, i32, i32, i32
  }
}

</mosaic_0001>

<llo_original>
// kernel: custom-call
$region0: #{custom-call}
  %s0 = inlined_call_operand.vmem [shape: f32[2,2,8,9], index: 0, kind: input, shape index: {}]
  %s1 = inlined_call_operand.vmem [shape: f32[2,2,8,9], index: 1, kind: input, shape index: {}]
  %s2 = inlined_call_operand.hbm [shape: c64[2,2,8,9], index: 2, kind: output, shape index: {}]
  %s3 = scalar_lea.hbm %s2, 512
  $region1: #{custom-call} parent=0
    #allocation0 [shape = 's32[1]{0}', space=sflag, size = 0x4, scoped, tag = 'scoped memory for custom-call']
    %4 = vsyncpa [#allocation0], 0
    %s5 = sshll.u32 %s0, 4
    %s6 = int_to_ptr.vmem [resolvable:$true] %s5
    %8 = dma.vmem_to_hbm [thread:$0]  %s6, 512, %s2, [#allocation0]
    %9 = dma.done [#allocation0], 512
    %10 = vsyncpa [#allocation0], 1
  $region2: #{custom-call} parent=0
    #allocation1 [shape = 's32[1]{0}', space=sflag, size = 0x4, scoped, tag = 'scoped memory for custom-call']
    %11 = vsyncpa [#allocation1], 0
    %s12 = sshll.u32 %s1, 4
    %s13 = int_to_ptr.vmem [resolvable:$true] %s12
    %15 = dma.vmem_to_hbm [thread:$0]  %s13, 512, %s3, [#allocation1]
    %16 = dma.done [#allocation1], 512
    %17 = vsyncpa [#allocation1], 1

</llo_original>
